<compile_context>
chip_gen: v6e
topology: v6e:2x2x1
jax: 0.10.0
libtpu: 0.0.40
codegen_flags: <defaults>
</compile_context>

<pallas_src>
import functools

import jax
import jax.numpy as jnp
from jax import lax
from jax.experimental import pallas as pl
from jax.experimental.pallas import tpu as pltpu

LN_EPS = 1e-5  # nn.LayerNorm default


# --------------------------------------------------------------------------- #
# Kernel bodies
# --------------------------------------------------------------------------- #
def _attn_core(q_all, k_all, v_all, mask_int, wfc, bfc, gamma, beta, residual,
               o_ref, a_ref, *, n_head, d_k, d_v, inv_temp, eps):
    """Per-head attention + full-width fc + residual + LayerNorm.

    q_all : (Tq, H*d_k) f32    k_all : (Tk, H*d_k) f32    v_all : (Tk, H*d_v) f32
    mask_int : (Tm, Tk) int, Tm in {1, Tq}; nonzero = masked key
    """
    # Build the additive mask once (hoisted out of the head loop); broadcasts over Tq if Tm == 1.
    add_mask = jnp.where(mask_int != 0, jnp.float32(-1e30), jnp.float32(0.0))

    ctxs = []
    for h in range(n_head):                              # H is small & static -> fully unrolled
        q = q_all[:, h * d_k:(h + 1) * d_k].astype(jnp.bfloat16)
        k = k_all[:, h * d_k:(h + 1) * d_k].astype(jnp.bfloat16)
        v = v_all[:, h * d_v:(h + 1) * d_v].astype(jnp.bfloat16)
        # scores = (q @ k^T) / temperature + mask        (f32 accumulation, bf16 operands)
        s = lax.dot_general(q, k, (((1,), (1,)), ((), ())),
                            preferred_element_type=jnp.float32) * inv_temp
        s = s + add_mask
        s = s - jnp.max(s, axis=-1, keepdims=True)
        e = jnp.exp(s)
        p = e / jnp.sum(e, axis=-1, keepdims=True)       # exact softmax: rows sum to 1
        a_ref[h, 0] = p                                  # attention probabilities (f32)
        ctxs.append(jnp.dot(p.astype(jnp.bfloat16), v,
                            preferred_element_type=jnp.float32))   # (Tq, d_v)

    ctx_all = ctxs[0] if n_head == 1 else jnp.concatenate(ctxs, axis=-1)   # (Tq, H*d_v)

    # Single full-width fc (K = H*d_v), + residual; dropout = identity (eval).
    y = jnp.dot(ctx_all.astype(jnp.bfloat16), wfc,
                preferred_element_type=jnp.float32) + bfc + residual
    mu = jnp.mean(y, axis=-1, keepdims=True)
    var = jnp.mean(jnp.square(y - mu), axis=-1, keepdims=True)
    o_ref[0] = (y - mu) * lax.rsqrt(var + eps) * gamma + beta


def _mha_self_kernel(mask_ref, x_ref, wqkv_ref, bqkv_ref, wfc_ref, bfc_ref,
                     g_ref, be_ref, o_ref, a_ref, *, n_head, d_k, d_v, inv_temp, eps):
    # Self-attention: one fused full-width (d_model -> H*(2*d_k+d_v)) projection.
    x = x_ref[0]                                          # (T, d_model) f32, also the residual
    qkv = jnp.dot(x.astype(jnp.bfloat16), wqkv_ref[...],
                  preferred_element_type=jnp.float32) + bqkv_ref[...]
    nq = n_head * d_k
    _attn_core(qkv[:, :nq], qkv[:, nq:2 * nq], qkv[:, 2 * nq:], mask_ref[0],
               wfc_ref[...], bfc_ref[...], g_ref[...], be_ref[...], x, o_ref, a_ref,
               n_head=n_head, d_k=d_k, d_v=d_v, inv_temp=inv_temp, eps=eps)


def _mha_kvshared_kernel(mask_ref, xq_ref, xkv_ref, wq_ref, bq_ref, wkv_ref, bkv_ref,
                         wfc_ref, bfc_ref, g_ref, be_ref, o_ref, a_ref,
                         *, n_head, d_k, d_v, inv_temp, eps):
    # Cross-attention with k is v: single shared K/V activation read, fused K|V projection.
    xq = xq_ref[0]                                        # (Tq, d_model) f32, residual
    q_all = jnp.dot(xq.astype(jnp.bfloat16), wq_ref[...],
                    preferred_element_type=jnp.float32) + bq_ref[...]
    kv = jnp.dot(xkv_ref[0].astype(jnp.bfloat16), wkv_ref[...],
                 preferred_element_type=jnp.float32) + bkv_ref[...]
    nq = n_head * d_k
    _attn_core(q_all, kv[:, :nq], kv[:, nq:], mask_ref[0],
               wfc_ref[...], bfc_ref[...], g_ref[...], be_ref[...], xq, o_ref, a_ref,
               n_head=n_head, d_k=d_k, d_v=d_v, inv_temp=inv_temp, eps=eps)


def _mha_cross_kernel(mask_ref, xq_ref, xk_ref, xv_ref, wq_ref, bq_ref, wk_ref, bk_ref,
                      wv_ref, bv_ref, wfc_ref, bfc_ref, g_ref, be_ref, o_ref, a_ref,
                      *, n_head, d_k, d_v, inv_temp, eps):
    # General path: distinct q / k / v inputs, three full-width projections.
    xq = xq_ref[0]
    q_all = jnp.dot(xq.astype(jnp.bfloat16), wq_ref[...],
                    preferred_element_type=jnp.float32) + bq_ref[...]
    k_all = jnp.dot(xk_ref[0].astype(jnp.bfloat16), wk_ref[...],
                    preferred_element_type=jnp.float32) + bk_ref[...]
    v_all = jnp.dot(xv_ref[0].astype(jnp.bfloat16), wv_ref[...],
                    preferred_element_type=jnp.float32) + bv_ref[...]
    _attn_core(q_all, k_all, v_all, mask_ref[0],
               wfc_ref[...], bfc_ref[...], g_ref[...], be_ref[...], xq, o_ref, a_ref,
               n_head=n_head, d_k=d_k, d_v=d_v, inv_temp=inv_temp, eps=eps)


# --------------------------------------------------------------------------- #
# Generation-aware VMEM limit
# --------------------------------------------------------------------------- #
def _vmem_limit_bytes(est_bytes):
    cap = 64 * 1024 * 1024            # conservative floor = v7x physical VMEM per TensorCore
    try:
        cap = int(getattr(pltpu.get_tpu_info(), "vmem_capacity_bytes", cap))
    except Exception:
        pass
    want = max(int(est_bytes) + (16 << 20), 32 << 20)     # real footprint + headroom
    return int(min(want, int(cap * 0.9)))


# --------------------------------------------------------------------------- #
# pallas_call wrapper (MultiHeadAttention.forward)
# --------------------------------------------------------------------------- #
def multi_head_attention(q_in, k_in, v_in, params, mask=None):
    """mask: None, (B, Tk) bool key-padding mask (preferred), or (B, Tq, Tk) bool."""
    B, Tq, d_model = q_in.shape
    Tk = k_in.shape[1]
    assert v_in.shape[1] == Tk, "len_k must equal len_v"
    H, d_k, d_v = params['n_head'], params['d_k'], params['d_v']
    inv_temp = 1.0 / (float(d_k) ** 0.5)
    bf16 = jnp.bfloat16

    # ---- mask: compact forms only; dense f32 additive mask is never materialized -------------
    if mask is None:
        mask_arr = jnp.zeros((B, 1, Tk), jnp.int32)
    elif mask.ndim == 2:                                   # (B, Tk) key padding -> tiny row
        mask_arr = mask.astype(jnp.int32).reshape(B, 1, Tk)
    else:                                                  # general (B, Tq, Tk): ship as int8
        mask_arr = mask.astype(jnp.int8)
    Tm = mask_arr.shape[1]

    # ---- shared weights / specs ---------------------------------------------------------------
    wfc = params['fc_w'].astype(bf16)                      # (H*d_v, d_model)
    bfc, ln_g, ln_b = params['fc_b'], params['ln_g'], params['ln_b']

    def w_spec(arr):                                       # resident (constant index) 2D block
        return pl.BlockSpec(arr.shape, lambda b: (0, 0))

    def act_spec(T):
        return pl.BlockSpec((1, T, d_model), lambda b: (b, 0, 0))

    mask_spec = pl.BlockSpec((1, Tm, Tk), lambda b: (b, 0, 0))
    tail_args = (wfc, bfc, ln_g, ln_b)
    tail_specs = [w_spec(wfc), w_spec(bfc), w_spec(ln_g), w_spec(ln_b)]

    out_shape = (jax.ShapeDtypeStruct((B, Tq, d_model), jnp.float32),
                 jax.ShapeDtypeStruct((H, B, Tq, Tk), jnp.float32))
    out_specs = (pl.BlockSpec((1, Tq, d_model), lambda b: (b, 0, 0)),
                 pl.BlockSpec((H, 1, Tq, Tk), lambda b: (0, b, 0, 0)))

    kw = dict(n_head=H, d_k=d_k, d_v=d_v, inv_temp=inv_temp, eps=LN_EPS)

    if (q_in is k_in) and (k_in is v_in):
        path, n_kv_acts = "self", 0
        wqkv = jnp.concatenate([params['w_qs'], params['w_ks'], params['w_vs']], axis=1).astype(bf16)
        bqkv = jnp.concatenate([params['b_qs'], params['b_ks'], params['b_vs']], axis=1)
        kernel = functools.partial(_mha_self_kernel, **kw)
        args = (mask_arr, q_in, wqkv, bqkv) + tail_args
        in_specs = [mask_spec, act_spec(Tq), w_spec(wqkv), w_spec(bqkv)] + tail_specs
    elif k_in is v_in:
        path, n_kv_acts = "kv", 1
        wq, bq = params['w_qs'].astype(bf16), params['b_qs']
        wkv = jnp.concatenate([params['w_ks'], params['w_vs']], axis=1).astype(bf16)
        bkv = jnp.concatenate([params['b_ks'], params['b_vs']], axis=1)
        kernel = functools.partial(_mha_kvshared_kernel, **kw)
        args = (mask_arr, q_in, k_in, wq, bq, wkv, bkv) + tail_args
        in_specs = [mask_spec, act_spec(Tq), act_spec(Tk),
                    w_spec(wq), w_spec(bq), w_spec(wkv), w_spec(bkv)] + tail_specs
    else:
        path, n_kv_acts = "cross", 2
        wq, bq = params['w_qs'].astype(bf16), params['b_qs']
        wk, bk = params['w_ks'].astype(bf16), params['b_ks']
        wv, bv = params['w_vs'].astype(bf16), params['b_vs']
        kernel = functools.partial(_mha_cross_kernel, **kw)
        args = (mask_arr, q_in, k_in, v_in, wq, bq, wk, bk, wv, bv) + tail_args
        in_specs = [mask_spec, act_spec(Tq), act_spec(Tk), act_spec(Tk),
                    w_spec(wq), w_spec(bq), w_spec(wk), w_spec(bk),
                    w_spec(wv), w_spec(bv)] + tail_specs

    # ---- generation-aware VMEM footprint estimate ---------------------------------------------
    f32 = 4
    dqkv = H * (2 * d_k + d_v)
    blk_in = (Tq * d_model * f32 + n_kv_acts * Tk * d_model * f32
              + Tm * Tk * mask_arr.dtype.itemsize)
    w_bytes = (d_model * dqkv * 2 + dqkv * f32 + H * d_v * d_model * 2 + 3 * d_model * f32)
    blk_out = Tq * d_model * f32 + H * Tq * Tk * f32
    tmp = (Tq + 2 * Tk) * dqkv * f32 + 3 * Tq * Tk * f32 + 2 * Tq * H * d_v * f32
    est = 2 * (blk_in + blk_out) + 2 * w_bytes + tmp

    out, attn4 = pl.pallas_call(
        kernel,
        out_shape=out_shape,
        grid=(B,),
        in_specs=in_specs,
        out_specs=out_specs,
        compiler_params=pltpu.CompilerParams(
            dimension_semantics=("parallel",),              # batch across TCs on v7x
            vmem_limit_bytes=_vmem_limit_bytes(est)),
    )(*args)

    # (H, B, Tq, Tk) -> (H*B, Tq, Tk): free metadata reshape, matches the module's attn layout.
    return out, attn4.reshape(H * B, Tq, Tk)


# --------------------------------------------------------------------------- #
# Deterministic parameter init (mirrors the module's shapes / init styles)
# --------------------------------------------------------------------------- #
def init_params(key, d_model, n_head, d_k, d_v):
    ks = jax.random.split(key, 8)
    std_qk = (2.0 / (d_model + d_k)) ** 0.5
    std_v = (2.0 / (d_model + d_v)) ** 0.5
    fc_std = (2.0 / (n_head * d_v + d_model)) ** 0.5   # xavier_normal
    return {
        'n_head': n_head, 'd_k': d_k, 'd_v': d_v,
        # Linear weights stored pre-transposed as (in, out): y = x @ W + b
        'w_qs': std_qk * jax.random.normal(ks[0], (d_model, n_head * d_k), jnp.float32),
        'b_qs': 0.05 * jax.random.normal(ks[1], (1, n_head * d_k), jnp.float32),
        'w_ks': std_qk * jax.random.normal(ks[2], (d_model, n_head * d_k), jnp.float32),
        'b_ks': 0.05 * jax.random.normal(ks[3], (1, n_head * d_k), jnp.float32),
        'w_vs': std_v * jax.random.normal(ks[4], (d_model, n_head * d_v), jnp.float32),
        'b_vs': 0.05 * jax.random.normal(ks[5], (1, n_head * d_v), jnp.float32),
        'fc_w': fc_std * jax.random.normal(ks[6], (n_head * d_v, d_model), jnp.float32),
        'fc_b': 0.05 * jax.random.normal(ks[7], (1, d_model), jnp.float32),
        'ln_g': jnp.ones((1, d_model), jnp.float32),
        'ln_b': jnp.zeros((1, d_model), jnp.float32),
    }


# --------------------------------------------------------------------------- #
# Pure-JAX reference (mirror of the PyTorch forward) for correctness check
# --------------------------------------------------------------------------- #
def _layer_norm(x, g, b, eps=LN_EPS):
    mu = jnp.mean(x, -1, keepdims=True)
    var = jnp.mean((x - mu) ** 2, -1, keepdims=True)
    return (x - mu) / jnp.sqrt(var + eps) * g + b


def ref_multi_head_attention(q_in, k_in, v_in, p, mask=None):
    B, Tq, _ = q_in.shape
    Tk = k_in.shape[1]
    H, d_k, d_v = p['n_head'], p['d_k'], p['d_v']
    residual = q_in
    q = q_in @ p['w_qs'] + p['b_qs']
    k = k_in @ p['w_ks'] + p['b_ks']
    v = v_in @ p['w_vs'] + p['b_vs']

    def heads(t, T, d):
        return t.reshape(B, T, H, d).transpose(2, 0, 1, 3).reshape(H * B, T, d)

    qh, kh, vh = heads(q, Tq, d_k), heads(k, Tk, d_k), heads(v, Tk, d_v)
    attn = jnp.einsum('btd,bsd->bts', qh, kh) / (d_k ** 0.5)
    if mask is not None:
        m = jnp.tile(mask, (H, 1, 1))
        attn = jnp.where(m, -jnp.inf, attn)
    attn = jax.nn.softmax(attn, axis=2)
    out = jnp.einsum('bts,bsd->btd', attn, vh)
    out = out.reshape(H, B, Tq, d_v).transpose(1, 2, 0, 3).reshape(B, Tq, H * d_v)
    out = out @ p['fc_w'] + p['fc_b']
    out = _layer_norm(out + residual, p['ln_g'], p['ln_b'])
    return out, attn


# --------------------------------------------------------------------------- #
if __name__ == "__main__":
    B, T, d_model = 2, 16, 32
    n_head, d_k, d_v = 2, 16, 16

    key = jax.random.PRNGKey(0)
    k_x, k_q2, k_kv, k_k3, k_v3, k_p = jax.random.split(key, 6)
    params = init_params(k_p, d_model, n_head, d_k, d_v)
    x = jax.random.normal(k_x, (B, T, d_model), jnp.float32)

    # key-padding mask: second sequence has 3 trailing pad frames (True = masked key)
    lengths = jnp.array([T, T - 3])
    key_pad = jnp.arange(T)[None, :] >= lengths[:, None]            # (B, T)

    # ---- 1) self-attention (fused-QKV fast path, compact key-padding mask) ----
    out, attn = multi_head_attention(x, x, x, params, mask=key_pad)
    jax.block_until_ready((out, attn))
    ref_out, ref_attn = ref_multi_head_attention(
        x, x, x, params, mask=jnp.broadcast_to(key_pad[:, None, :], (B, T, T)))
    assert out.shape == (B, T, d_model) and attn.shape == (n_head * B, T, T)
    err_o = float(jnp.max(jnp.abs(out - ref_out)))
    err_a = float(jnp.max(jnp.abs(attn - ref_attn)))
    assert err_o < 1e-1, f"self out max err {err_o}"        # bf16 matmul operands -> loose tol
    assert err_a < 3e-2, f"self attn max err {err_a}"

    # ---- 2) cross-attention with shared K/V activations (k is v) ----
    Tq = 8
    q2 = jax.random.normal(k_q2, (B, Tq, d_model), jnp.float32)
    kv = jax.random.normal(k_kv, (B, T, d_model), jnp.float32)
    out2, attn2 = multi_head_attention(q2, kv, kv, params, mask=key_pad)
    jax.block_until_ready((out2, attn2))
    ref_out2, ref_attn2 = ref_multi_head_attention(
        q2, kv, kv, params, mask=jnp.broadcast_to(key_pad[:, None, :], (B, Tq, T)))
    assert out2.shape == (B, Tq, d_model) and attn2.shape == (n_head * B, Tq, T)
    err_o2 = float(jnp.max(jnp.abs(out2 - ref_out2)))
    err_a2 = float(jnp.max(jnp.abs(attn2 - ref_attn2)))
    assert err_o2 < 1e-1, f"kv-shared out max err {err_o2}"
    assert err_a2 < 3e-2, f"kv-shared attn max err {err_a2}"

    # ---- 3) general cross-attention (distinct k / v, dense boolean mask fallback) ----
    k3 = jax.random.normal(k_k3, (B, T, d_model), jnp.float32)
    v3 = jax.random.normal(k_v3, (B, T, d_model), jnp.float32)
    dense_mask = jnp.broadcast_to(key_pad[:, None, :], (B, Tq, T))
    out3, attn3 = multi_head_attention(q2, k3, v3, params, mask=dense_mask)
    jax.block_until_ready((out3, attn3))
    ref_out3, ref_attn3 = ref_multi_head_attention(q2, k3, v3, params, mask=dense_mask)
    assert out3.shape == (B, Tq, d_model) and attn3.shape == (n_head * B, Tq, T)
    err_o3 = float(jnp.max(jnp.abs(out3 - ref_out3)))
    err_a3 = float(jnp.max(jnp.abs(attn3 - ref_attn3)))
    assert err_o3 < 1e-1, f"cross out max err {err_o3}"
    assert err_a3 < 3e-2, f"cross attn max err {err_a3}"

    print("KERNEL_OK")
</pallas_src>

<mosaic_0001>
module attributes {stable_mosaic.version = 11 : i64} {
  func.func @_mha_self_kernel(%arg0: i32, %arg1: memref<1x1x16xi32, #tpu.memory_space<vmem>>, %arg2: memref<1x16x32xf32, #tpu.memory_space<vmem>>, %arg3: memref<32x96xbf16, #tpu.memory_space<vmem>>, %arg4: memref<1x96xf32, #tpu.memory_space<vmem>>, %arg5: memref<32x32xbf16, #tpu.memory_space<vmem>>, %arg6: memref<1x32xf32, #tpu.memory_space<vmem>>, %arg7: memref<1x32xf32, #tpu.memory_space<vmem>>, %arg8: memref<1x32xf32, #tpu.memory_space<vmem>>, %arg9: memref<1x16x32xf32, #tpu.memory_space<vmem>>, %arg10: memref<2x1x16x16xf32, #tpu.memory_space<vmem>>) attributes {dimension_semantics = [#tpu.dimension_semantics<parallel>], iteration_bounds = array<i64: 2>, scalar_prefetch = 0 : i64, scratch_operands = 0 : i64, tpu.core_type = #tpu.core_type<tc>, window_params = [{transform_indices = @transform_0, window_bounds = array<i64: 1, 1, 16>}, {transform_indices = @transform_1, window_bounds = array<i64: 1, 16, 32>}, {pipeline_mode = #tpu.pipeline_mode<synchronous>, transform_indices = @transform_2, window_bounds = array<i64: 32, 96>}, {pipeline_mode = #tpu.pipeline_mode<synchronous>, transform_indices = @transform_3, window_bounds = array<i64: 1, 96>}, {pipeline_mode = #tpu.pipeline_mode<synchronous>, transform_indices = @transform_4, window_bounds = array<i64: 32, 32>}, {pipeline_mode = #tpu.pipeline_mode<synchronous>, transform_indices = @transform_5, window_bounds = array<i64: 1, 32>}, {pipeline_mode = #tpu.pipeline_mode<synchronous>, transform_indices = @transform_6, window_bounds = array<i64: 1, 32>}, {pipeline_mode = #tpu.pipeline_mode<synchronous>, transform_indices = @transform_7, window_bounds = array<i64: 1, 32>}, {transform_indices = @transform_8, window_bounds = array<i64: 1, 16, 32>}, {transform_indices = @transform_9, window_bounds = array<i64: 2, 1, 16, 16>}]} {
    %c0 = arith.constant 0 : index
    %c0_0 = arith.constant 0 : index
    %c0_1 = arith.constant 0 : index
    %0 = vector.load %arg2[%c0, %c0_0, %c0_1] : memref<1x16x32xf32, #tpu.memory_space<vmem>>, vector<1x16x32xf32>
    %1 = vector.shape_cast %0 : vector<1x16x32xf32> to vector<16x32xf32>
    %2 = arith.truncf %1 : vector<16x32xf32> to vector<16x32xbf16>
    %c0_2 = arith.constant 0 : index
    %c0_3 = arith.constant 0 : index
    %3 = vector.load %arg3[%c0_2, %c0_3] : memref<32x96xbf16, #tpu.memory_space<vmem>>, vector<32x96xbf16>
    %cst = arith.constant dense<0.000000e+00> : vector<16x96xf32>
    %4 = tpu.matmul %2, %3, %cst {dimension_numbers = #tpu.dot_dimension_numbers<[1], [0], [0], [1], [0, 0, 1, 1], [], []>} : vector<16x32xbf16>, vector<32x96xbf16>, vector<16x96xf32> -> vector<16x96xf32>
    %c0_4 = arith.constant 0 : index
    %c0_5 = arith.constant 0 : index
    %5 = vector.load %arg4[%c0_4, %c0_5] : memref<1x96xf32, #tpu.memory_space<vmem>>, vector<1x96xf32>
    %6 = vector.broadcast %5 : vector<1x96xf32> to vector<16x96xf32>
    %7 = arith.addf %4, %6 : vector<16x96xf32>
    %8 = vector.extract_strided_slice %7 {offsets = [0, 0], sizes = [16, 32], strides = [1, 1]} : vector<16x96xf32> to vector<16x32xf32>
    %9 = vector.extract_strided_slice %7 {offsets = [0, 32], sizes = [16, 32], strides = [1, 1]} : vector<16x96xf32> to vector<16x32xf32>
    %10 = vector.extract_strided_slice %7 {offsets = [0, 64], sizes = [16, 32], strides = [1, 1]} : vector<16x96xf32> to vector<16x32xf32>
    %c0_6 = arith.constant 0 : index
    %c0_7 = arith.constant 0 : index
    %c0_8 = arith.constant 0 : index
    %11 = vector.load %arg1[%c0_6, %c0_7, %c0_8] : memref<1x1x16xi32, #tpu.memory_space<vmem>>, vector<1x1x16xi32>
    %12 = vector.shape_cast %11 : vector<1x1x16xi32> to vector<1x16xi32>
    %c0_9 = arith.constant 0 : index
    %c0_10 = arith.constant 0 : index
    %13 = vector.load %arg5[%c0_9, %c0_10] : memref<32x32xbf16, #tpu.memory_space<vmem>>, vector<32x32xbf16>
    %c0_11 = arith.constant 0 : index
    %c0_12 = arith.constant 0 : index
    %14 = vector.load %arg6[%c0_11, %c0_12] : memref<1x32xf32, #tpu.memory_space<vmem>>, vector<1x32xf32>
    %c0_13 = arith.constant 0 : index
    %c0_14 = arith.constant 0 : index
    %15 = vector.load %arg7[%c0_13, %c0_14] : memref<1x32xf32, #tpu.memory_space<vmem>>, vector<1x32xf32>
    %c0_15 = arith.constant 0 : index
    %c0_16 = arith.constant 0 : index
    %16 = vector.load %arg8[%c0_15, %c0_16] : memref<1x32xf32, #tpu.memory_space<vmem>>, vector<1x32xf32>
    %c0_i32 = arith.constant 0 : i32
    %17 = vector.broadcast %c0_i32 : i32 to vector<1x16xi32>
    %18 = arith.cmpi ne, %12, %17 : vector<1x16xi32>
    %cst_17 = arith.constant -1.000000e+30 : f32
    %cst_18 = arith.constant 0.000000e+00 : f32
    %19 = vector.broadcast %cst_17 : f32 to vector<1x16xf32>
    %20 = vector.broadcast %cst_18 : f32 to vector<1x16xf32>
    %21 = arith.select %18, %19, %20 : vector<1x16xi1>, vector<1x16xf32>
    %22 = vector.extract_strided_slice %8 {offsets = [0, 0], sizes = [16, 16], strides = [1, 1]} : vector<16x32xf32> to vector<16x16xf32>
    %23 = arith.truncf %22 : vector<16x16xf32> to vector<16x16xbf16>
    %24 = vector.extract_strided_slice %9 {offsets = [0, 0], sizes = [16, 16], strides = [1, 1]} : vector<16x32xf32> to vector<16x16xf32>
    %25 = arith.truncf %24 : vector<16x16xf32> to vector<16x16xbf16>
    %26 = vector.extract_strided_slice %10 {offsets = [0, 0], sizes = [16, 16], strides = [1, 1]} : vector<16x32xf32> to vector<16x16xf32>
    %27 = arith.truncf %26 : vector<16x16xf32> to vector<16x16xbf16>
    %cst_19 = arith.constant dense<0.000000e+00> : vector<16x16xf32>
    %28 = tpu.matmul %23, %25, %cst_19 {dimension_numbers = #tpu.dot_dimension_numbers<[1], [1], [0], [0], [0, 0, 1, 0], [], []>} : vector<16x16xbf16>, vector<16x16xbf16>, vector<16x16xf32> -> vector<16x16xf32>
    %cst_20 = arith.constant 2.500000e-01 : f32
    %29 = vector.broadcast %cst_20 : f32 to vector<16x16xf32>
    %30 = arith.mulf %28, %29 : vector<16x16xf32>
    %31 = vector.broadcast %21 : vector<1x16xf32> to vector<16x16xf32>
    %32 = arith.addf %30, %31 : vector<16x16xf32>
    %cst_21 = arith.constant dense<0xFF800000> : vector<16xf32>
    %33 = vector.multi_reduction <maximumf>, %32, %cst_21 [1] : vector<16x16xf32> to vector<16xf32>
    %34 = vector.shape_cast %33 : vector<16xf32> to vector<16x1xf32>
    %35 = vector.broadcast %34 : vector<16x1xf32> to vector<16x16xf32>
    %36 = arith.subf %32, %35 : vector<16x16xf32>
    %37 = math.exp %36 : vector<16x16xf32>
    %cst_22 = arith.constant dense<0.000000e+00> : vector<16xf32>
    %38 = vector.multi_reduction <add>, %37, %cst_22 [1] : vector<16x16xf32> to vector<16xf32>
    %39 = vector.shape_cast %38 : vector<16xf32> to vector<16x1xf32>
    %40 = vector.broadcast %39 : vector<16x1xf32> to vector<16x16xf32>
    %41 = arith.divf %37, %40 : vector<16x16xf32>
    %c0_23 = arith.constant 0 : index
    %c0_24 = arith.constant 0 : index
    %c0_25 = arith.constant 0 : index
    %c0_26 = arith.constant 0 : index
    %42 = vector.load %arg10[%c0_23, %c0_24, %c0_25, %c0_26] : memref<2x1x16x16xf32, #tpu.memory_space<vmem>>, vector<1x1x16x16xf32>
    %43 = vector.shape_cast %42 : vector<1x1x16x16xf32> to vector<16x16xf32>
    %44 = vector.shape_cast %41 : vector<16x16xf32> to vector<1x1x16x16xf32>
    tpu.vector_store %arg10[%c0_23, %c0_24, %c0_25, %c0_26], %44 {strides = array<i32>} : memref<2x1x16x16xf32, #tpu.memory_space<vmem>>, vector<1x1x16x16xf32>,
    %45 = arith.truncf %41 : vector<16x16xf32> to vector<16x16xbf16>
    %cst_27 = arith.constant dense<0.000000e+00> : vector<16x16xf32>
    %46 = tpu.matmul %45, %27, %cst_27 {dimension_numbers = #tpu.dot_dimension_numbers<[1], [0], [0], [1], [0, 0, 1, 1], [], []>} : vector<16x16xbf16>, vector<16x16xbf16>, vector<16x16xf32> -> vector<16x16xf32>
    %47 = vector.extract_strided_slice %8 {offsets = [0, 16], sizes = [16, 16], strides = [1, 1]} : vector<16x32xf32> to vector<16x16xf32>
    %48 = arith.truncf %47 : vector<16x16xf32> to vector<16x16xbf16>
    %49 = vector.extract_strided_slice %9 {offsets = [0, 16], sizes = [16, 16], strides = [1, 1]} : vector<16x32xf32> to vector<16x16xf32>
    %50 = arith.truncf %49 : vector<16x16xf32> to vector<16x16xbf16>
    %51 = vector.extract_strided_slice %10 {offsets = [0, 16], sizes = [16, 16], strides = [1, 1]} : vector<16x32xf32> to vector<16x16xf32>
    %52 = arith.truncf %51 : vector<16x16xf32> to vector<16x16xbf16>
    %cst_28 = arith.constant dense<0.000000e+00> : vector<16x16xf32>
    %53 = tpu.matmul %48, %50, %cst_28 {dimension_numbers = #tpu.dot_dimension_numbers<[1], [1], [0], [0], [0, 0, 1, 0], [], []>} : vector<16x16xbf16>, vector<16x16xbf16>, vector<16x16xf32> -> vector<16x16xf32>
    %cst_29 = arith.constant 2.500000e-01 : f32
    %54 = vector.broadcast %cst_29 : f32 to vector<16x16xf32>
    %55 = arith.mulf %53, %54 : vector<16x16xf32>
    %56 = vector.broadcast %21 : vector<1x16xf32> to vector<16x16xf32>
    %57 = arith.addf %55, %56 : vector<16x16xf32>
    %cst_30 = arith.constant dense<0xFF800000> : vector<16xf32>
    %58 = vector.multi_reduction <maximumf>, %57, %cst_30 [1] : vector<16x16xf32> to vector<16xf32>
    %59 = vector.shape_cast %58 : vector<16xf32> to vector<16x1xf32>
    %60 = vector.broadcast %59 : vector<16x1xf32> to vector<16x16xf32>
    %61 = arith.subf %57, %60 : vector<16x16xf32>
    %62 = math.exp %61 : vector<16x16xf32>
    %cst_31 = arith.constant dense<0.000000e+00> : vector<16xf32>
    %63 = vector.multi_reduction <add>, %62, %cst_31 [1] : vector<16x16xf32> to vector<16xf32>
    %64 = vector.shape_cast %63 : vector<16xf32> to vector<16x1xf32>
    %65 = vector.broadcast %64 : vector<16x1xf32> to vector<16x16xf32>
    %66 = arith.divf %62, %65 : vector<16x16xf32>
    %c1 = arith.constant 1 : index
    %c0_32 = arith.constant 0 : index
    %c0_33 = arith.constant 0 : index
    %c0_34 = arith.constant 0 : index
    %67 = vector.load %arg10[%c1, %c0_32, %c0_33, %c0_34] : memref<2x1x16x16xf32, #tpu.memory_space<vmem>>, vector<1x1x16x16xf32>
    %68 = vector.shape_cast %67 : vector<1x1x16x16xf32> to vector<16x16xf32>
    %69 = vector.shape_cast %66 : vector<16x16xf32> to vector<1x1x16x16xf32>
    tpu.vector_store %arg10[%c1, %c0_32, %c0_33, %c0_34], %69 {strides = array<i32>} : memref<2x1x16x16xf32, #tpu.memory_space<vmem>>, vector<1x1x16x16xf32>,
    %70 = arith.truncf %66 : vector<16x16xf32> to vector<16x16xbf16>
    %cst_35 = arith.constant dense<0.000000e+00> : vector<16x16xf32>
    %71 = tpu.matmul %70, %52, %cst_35 {dimension_numbers = #tpu.dot_dimension_numbers<[1], [0], [0], [1], [0, 0, 1, 1], [], []>} : vector<16x16xbf16>, vector<16x16xbf16>, vector<16x16xf32> -> vector<16x16xf32>
    %72 = tpu.concatenate %46, %71 in 1 : vector<16x16xf32>, vector<16x16xf32> -> vector<16x32xf32>
    %73 = arith.truncf %72 : vector<16x32xf32> to vector<16x32xbf16>
    %cst_36 = arith.constant dense<0.000000e+00> : vector<16x32xf32>
    %74 = tpu.matmul %73, %13, %cst_36 {dimension_numbers = #tpu.dot_dimension_numbers<[1], [0], [0], [1], [0, 0, 1, 1], [], []>} : vector<16x32xbf16>, vector<32x32xbf16>, vector<16x32xf32> -> vector<16x32xf32>
    %75 = vector.broadcast %14 : vector<1x32xf32> to vector<16x32xf32>
    %76 = arith.addf %74, %75 : vector<16x32xf32>
    %77 = arith.addf %76, %1 : vector<16x32xf32>
    %cst_37 = arith.constant dense<0.000000e+00> : vector<16xf32>
    %78 = vector.multi_reduction <add>, %77, %cst_37 [1] : vector<16x32xf32> to vector<16xf32>
    %79 = vector.shape_cast %78 : vector<16xf32> to vector<16x1xf32>
    %cst_38 = arith.constant 3.200000e+01 : f32
    %80 = vector.broadcast %cst_38 : f32 to vector<16x1xf32>
    %81 = arith.divf %79, %80 : vector<16x1xf32>
    %82 = vector.broadcast %81 : vector<16x1xf32> to vector<16x32xf32>
    %83 = arith.subf %77, %82 : vector<16x32xf32>
    %84 = arith.mulf %83, %83 : vector<16x32xf32>
    %cst_39 = arith.constant dense<0.000000e+00> : vector<16xf32>
    %85 = vector.multi_reduction <add>, %84, %cst_39 [1] : vector<16x32xf32> to vector<16xf32>
    %86 = vector.shape_cast %85 : vector<16xf32> to vector<16x1xf32>
    %cst_40 = arith.constant 3.200000e+01 : f32
    %87 = vector.broadcast %cst_40 : f32 to vector<16x1xf32>
    %88 = arith.divf %86, %87 : vector<16x1xf32>
    %89 = vector.broadcast %81 : vector<16x1xf32> to vector<16x32xf32>
    %90 = arith.subf %77, %89 : vector<16x32xf32>
    %cst_41 = arith.constant 9.99999974E-6 : f32
    %91 = vector.broadcast %cst_41 : f32 to vector<16x1xf32>
    %92 = arith.addf %88, %91 : vector<16x1xf32>
    %93 = math.rsqrt %92 : vector<16x1xf32>
    %94 = vector.broadcast %93 : vector<16x1xf32> to vector<16x32xf32>
    %95 = arith.mulf %90, %94 : vector<16x32xf32>
    %96 = vector.broadcast %15 : vector<1x32xf32> to vector<16x32xf32>
    %97 = arith.mulf %95, %96 : vector<16x32xf32>
    %98 = vector.broadcast %16 : vector<1x32xf32> to vector<16x32xf32>
    %99 = arith.addf %97, %98 : vector<16x32xf32>
    %c0_42 = arith.constant 0 : index
    %c0_43 = arith.constant 0 : index
    %c0_44 = arith.constant 0 : index
    %100 = vector.load %arg9[%c0_42, %c0_43, %c0_44] : memref<1x16x32xf32, #tpu.memory_space<vmem>>, vector<1x16x32xf32>
    %101 = vector.shape_cast %100 : vector<1x16x32xf32> to vector<16x32xf32>
    %102 = vector.shape_cast %99 : vector<16x32xf32> to vector<1x16x32xf32>
    tpu.vector_store %arg9[%c0_42, %c0_43, %c0_44], %102 {strides = array<i32>} : memref<1x16x32xf32, #tpu.memory_space<vmem>>, vector<1x16x32xf32>,
    return
  }
  func.func @transform_0(%arg0: i32) -> (i32, i32, i32) {
    %c0_i32 = arith.constant 0 : i32
    %c0_i32_0 = arith.constant 0 : i32
    %c0_i32_1 = arith.constant 0 : i32
    return %arg0, %c0_i32, %c0_i32_0 : i32, i32, i32
  }
  func.func @transform_1(%arg0: i32) -> (i32, i32, i32) {
    %c0_i32 = arith.constant 0 : i32
    %c0_i32_0 = arith.constant 0 : i32
    %c0_i32_1 = arith.constant 0 : i32
    return %arg0, %c0_i32, %c0_i32_0 : i32, i32, i32
  }
  func.func @transform_2(%arg0: i32) -> (i32, i32) {
    %c0_i32 = arith.constant 0 : i32
    %c0_i32_0 = arith.constant 0 : i32
    %c0_i32_1 = arith.constant 0 : i32
    return %c0_i32, %c0_i32_0 : i32, i32
  }
  func.func @transform_3(%arg0: i32) -> (i32, i32) {
    %c0_i32 = arith.constant 0 : i32
    %c0_i32_0 = arith.constant 0 : i32
    %c0_i32_1 = arith.constant 0 : i32
    return %c0_i32, %c0_i32_0 : i32, i32
  }
  func.func @transform_4(%arg0: i32) -> (i32, i32) {
    %c0_i32 = arith.constant 0 : i32
    %c0_i32_0 = arith.constant 0 : i32
    %c0_i32_1 = arith.constant 0 : i32
    return %c0_i32, %c0_i32_0 : i32, i32
  }
  func.func @transform_5(%arg0: i32) -> (i32, i32) {
    %c0_i32 = arith.constant 0 : i32
    %c0_i32_0 = arith.constant 0 : i32
    %c0_i32_1 = arith.constant 0 : i32
    return %c0_i32, %c0_i32_0 : i32, i32
  }
  func.func @transform_6(%arg0: i32) -> (i32, i32) {
    %c0_i32 = arith.constant 0 : i32
    %c0_i32_0 = arith.constant 0 : i32
    %c0_i32_1 = arith.constant 0 : i32
    return %c0_i32, %c0_i32_0 : i32, i32
  }
  func.func @transform_7(%arg0: i32) -> (i32, i32) {
    %c0_i32 = arith.constant 0 : i32
    %c0_i32_0 = arith.constant 0 : i32
    %c0_i32_1 = arith.constant 0 : i32
    return %c0_i32, %c0_i32_0 : i32, i32
  }
  func.func @transform_8(%arg0: i32) -> (i32, i32, i32) {
    %c0_i32 = arith.constant 0 : i32
    %c0_i32_0 = arith.constant 0 : i32
    %c0_i32_1 = arith.constant 0 : i32
    return %arg0, %c0_i32, %c0_i32_0 : i32, i32, i32
  }
  func.func @transform_9(%arg0: i32) -> (i32, i32, i32, i32) {
    %c0_i32 = arith.constant 0 : i32
    %c0_i32_0 = arith.constant 0 : i32
    %c0_i32_1 = arith.constant 0 : i32
    %c0_i32_2 = arith.constant 0 : i32
    return %c0_i32, %arg0, %c0_i32_0, %c0_i32_1 : i32, i32, i32, i32
  }
}

</mosaic_0001>

<llo_original>
// kernel: tpu_custom_call.1
$region0: #{tpu_custom_call.1}
  #allocation0 [shape = 'u32[]', space=smem, size = 0x4, offset = 0x4, fixed_abs, tag = 'smem constant byte address 0x4 - core index']
  #allocation1 [shape = 'u32[144,128]{1,0:T(1,128)}', space=vmem, size = 0x12000, scoped, tag = 'internal scratch']
  #allocation13 [shape = 's32[]', space=sflag, size = 0x4, offset = 0, fixed_abs, tag = 'sflag constant byte address 0x0 - dummy sync flag']
  %s0 = inlined_call_operand.hbm [shape: s32[2,1,16], index: 0, kind: input, shape index: {}]
  %s1 = inlined_call_operand.hbm [shape: f32[2,16,32], index: 1, kind: input, shape index: {}]
  %s2 = inlined_call_operand.hbm [shape: bf16[32,96], index: 2, kind: input, shape index: {}]
  %s3 = inlined_call_operand.vmem [shape: f32[1,96], index: 3, kind: input, shape index: {}]
  %s4 = inlined_call_operand.hbm [shape: bf16[32,32], index: 4, kind: input, shape index: {}]
  %s5 = inlined_call_operand.vmem [shape: f32[1,32], index: 5, kind: input, shape index: {}]
  %s6 = inlined_call_operand.vmem [shape: f32[1,32], index: 6, kind: input, shape index: {}]
  %s7 = inlined_call_operand.vmem [shape: f32[1,32], index: 7, kind: input, shape index: {}]
  %s8 = inlined_call_operand.hbm [shape: f32[2,16,32], index: 8, kind: output, shape index: {0}]
  %s9 = inlined_call_operand.hbm [shape: f32[2,2,16,16], index: 9, kind: output, shape index: {1}]
  %10 = xla_tuple %s8, %s9
  %s11 = sld [smem:[#allocation0]]
  $region89: #{tpu_custom_call.1} parent=0
    _
  %s13 = ssub.s32 1, %s11
  %s14 = scalar_select 0, %s13, %s11
  $region1: #{tpu_custom_call.1} parent=0
    #allocation2 [shape = 'u8[1024]{0}', space=vmem, size = 0x400, scoped, tag = 'input window, operand 0']
    #allocation3 [shape = 's32[2]{0}', space=sflag, size = 0x8, scoped, tag = 'scoped memory for tpu_custom_call.1']
    #allocation4 [shape = 's32[2]{0}', space=sflag, size = 0x8, scoped, tag = 'scoped memory for tpu_custom_call.1']
    #allocation5 [shape = 'u8[16384]{0}', space=vmem, size = 0x4000, scoped, tag = 'input window, operand 1']
    #allocation6 [shape = 's32[2]{0}', space=sflag, size = 0x8, scoped, tag = 'scoped memory for tpu_custom_call.1']
    #allocation7 [shape = 'u8[8192]{0}', space=vmem, size = 0x2000, scoped, tag = 'input window, operand 2, single buffered']
    #allocation8 [shape = 'u8[8192]{0}', space=vmem, size = 0x2000, scoped, tag = 'input window, operand 4, single buffered']
    #allocation9 [shape = 's32[1]{0}', space=sflag, size = 0x4, scoped, tag = 'scoped memory for tpu_custom_call.1']
    #allocation10 [shape = 'u8[16384]{0}', space=vmem, size = 0x4000, scoped, tag = 'output window, operand 0']
    #allocation11 [shape = 'u8[32768]{0}', space=vmem, size = 0x8000, scoped, tag = 'output window, operand 1']
    #allocation12 [shape = 's32[2]{0}', space=sflag, size = 0x8, scoped, tag = 'scoped memory for tpu_custom_call.1']
    %15 = vsyncpa [#allocation3], 0
    %s16 = scalar_lea.sflag [#allocation3], 1
    %17 = vsyncpa %s16, 0
    %18 = vsyncpa [#allocation6], 0
    %s19 = scalar_lea.sflag [#allocation6], 1
    %20 = vsyncpa %s19, 0
    %21 = vsyncpa [#allocation9], 0
    %22 = vsyncpa [#allocation4], 0
    %s23 = scalar_lea.sflag [#allocation4], 1
    %24 = vsyncpa %s23, 0
    %25 = vsyncpa [#allocation12], 0
    %s26 = scalar_lea.sflag [#allocation12], 1
    %27 = vsyncpa %s26, 0
    loop: start=0, step=1, limit=4
    $region2: #{tpu_custom_call.1} parent=1 // loop_pre_header
      _
    $region3: #{tpu_custom_call.1} parent=1 // loop_header
      %s29 = sphi 0, %s33
      %p30 = scmp.ge.s32.totalorder %s29, 4
      %s39 = sphi 0, %s41
      %s42 = sphi 0, %s39
      %s43 = sphi 0, %s42
      %s59 = sphi 0, %s43
      %s65 = sphi 0, %s67
      %s68 = sphi 0, %s65
      %s69 = sphi 0, %s68
      %s85 = sphi 0, %s69
      %s89 = sphi 0, %s89
      %s91 = sphi 0, %s89
      %s92 = sphi 0, %s91
      %s106 = sphi 0, %s92
      %s110 = sphi 0, %s110
      %s112 = sphi 0, %s110
      %s113 = sphi 0, %s112
      %s127 = sphi 0, %s113
      %s131 = sphi 0, %s131
      %s133 = sphi 0, %s131
      %s134 = sphi 0, %s133
      %s148 = sphi 0, %s134
      %s152 = sphi 0, %s152
      %s154 = sphi 0, %s152
      %s155 = sphi 0, %s154
      %s169 = sphi 0, %s155
      %s173 = sphi 0, %s173
      %s175 = sphi 0, %s173
      %s176 = sphi 0, %s175
      %s190 = sphi 0, %s176
      %s194 = sphi 0, %s194
      %s196 = sphi 0, %s194
      %s197 = sphi 0, %s196
      %s211 = sphi 0, %s197
      %s217 = sphi 0, %s219
      %s220 = sphi 0, %s217
      %s221 = sphi 0, %s220
      %s237 = sphi 0, %s221
      %s243 = sphi 0, %s245
      %s246 = sphi 0, %s243
      %s247 = sphi 0, %s246
      %s263 = sphi 0, %s247
    $region4: #{tpu_custom_call.1} parent=1 // loop_header_branch
      %32 = sbr.rel (%p30) target = $region8
    $region5: #{tpu_custom_call.1} parent=1 // loop_body
      %s34 = ssub.s32 %s29, 1
      %s35 = ssub.s32 %s29, 2
      %s36 = sadd.s32 %s29, 1
      %s37 = ssub.s32 %s29, %s36
      %p38 = scmp.eq.s32.totalorder %s37, 0
      %s40 = sadd.s32 %s39, 1
      %s41 = scalar_select %p38, %s39, %s40
      %p44 = pneg %p38
      %p45 = scmp.eq.s32.totalorder %s29, 1
      %p46 = por %p44, %p45
      %p47 = scmp.ne.s32.totalorder %s39, %s42
      %p48 = scmp.eq.s32.totalorder %s29, 0
      %p49 = por %p47, %p48
      %p50 = scmp.ne.s32.totalorder %s39, %s42
      %p51 = scmp.eq.s32.totalorder %s34, 1
      %p52 = por %p50, %p51
      %p53 = scmp.ne.s32.totalorder %s42, %s43
      %p54 = scmp.eq.s32.totalorder %s34, 0
      %p55 = por %p53, %p54
      %p56 = scmp.ne.s32.totalorder %s42, %s43
      %p57 = scmp.eq.s32.totalorder %s35, 1
      %p58 = por %p56, %p57
      %p60 = scmp.ne.s32.totalorder %s43, %s59
      %p61 = scmp.eq.s32.totalorder %s35, 0
      %p62 = por %p60, %p61
      %s63 = ssub.s32 %s29, %s36
      %p64 = scmp.eq.s32.totalorder %s63, 0
      %s66 = sadd.s32 %s65, 1
      %s67 = scalar_select %p64, %s65, %s66
      %p70 = pneg %p64
      %p71 = scmp.eq.s32.totalorder %s29, 1
      %p72 = por %p70, %p71
      %p73 = scmp.ne.s32.totalorder %s65, %s68
      %p74 = scmp.eq.s32.totalorder %s29, 0
      %p75 = por %p73, %p74
      %p76 = scmp.ne.s32.totalorder %s65, %s68
      %p77 = scmp.eq.s32.totalorder %s34, 1
      %p78 = por %p76, %p77
      %p79 = scmp.ne.s32.totalorder %s68, %s69
      %p80 = scmp.eq.s32.totalorder %s34, 0
      %p81 = por %p79, %p80
      %p82 = scmp.ne.s32.totalorder %s68, %s69
      %p83 = scmp.eq.s32.totalorder %s35, 1
      %p84 = por %p82, %p83
      %p86 = scmp.ne.s32.totalorder %s69, %s85
      %p87 = scmp.eq.s32.totalorder %s35, 0
      %p88 = por %p86, %p87
      %s90 = sadd.s32 %s89, 1
      %p93 = scmp.eq.s32.totalorder %s29, 1
      %p94 = scmp.ne.s32.totalorder %s89, %s91
      %p95 = scmp.eq.s32.totalorder %s29, 0
      %p96 = por %p94, %p95
      %p97 = scmp.ne.s32.totalorder %s89, %s91
      %p98 = scmp.eq.s32.totalorder %s34, 1
      %p99 = por %p97, %p98
      %p100 = scmp.ne.s32.totalorder %s91, %s92
      %p101 = scmp.eq.s32.totalorder %s34, 0
      %p102 = por %p100, %p101
      %p103 = scmp.ne.s32.totalorder %s91, %s92
      %p104 = scmp.eq.s32.totalorder %s35, 1
      %p105 = por %p103, %p104
      %p107 = scmp.ne.s32.totalorder %s92, %s106
      %p108 = scmp.eq.s32.totalorder %s35, 0
      %p109 = por %p107, %p108
      %s111 = sadd.s32 %s110, 1
      %p114 = scmp.eq.s32.totalorder %s29, 1
      %p115 = scmp.ne.s32.totalorder %s110, %s112
      %p116 = scmp.eq.s32.totalorder %s29, 0
      %p117 = por %p115, %p116
      %p118 = scmp.ne.s32.totalorder %s110, %s112
      %p119 = scmp.eq.s32.totalorder %s34, 1
      %p120 = por %p118, %p119
      %p121 = scmp.ne.s32.totalorder %s112, %s113
      %p122 = scmp.eq.s32.totalorder %s34, 0
      %p123 = por %p121, %p122
      %p124 = scmp.ne.s32.totalorder %s112, %s113
      %p125 = scmp.eq.s32.totalorder %s35, 1
      %p126 = por %p124, %p125
      %p128 = scmp.ne.s32.totalorder %s113, %s127
      %p129 = scmp.eq.s32.totalorder %s35, 0
      %p130 = por %p128, %p129
      %s132 = sadd.s32 %s131, 1
      %p135 = scmp.eq.s32.totalorder %s29, 1
      %p136 = scmp.ne.s32.totalorder %s131, %s133
      %p137 = scmp.eq.s32.totalorder %s29, 0
      %p138 = por %p136, %p137
      %p139 = scmp.ne.s32.totalorder %s131, %s133
      %p140 = scmp.eq.s32.totalorder %s34, 1
      %p141 = por %p139, %p140
      %p142 = scmp.ne.s32.totalorder %s133, %s134
      %p143 = scmp.eq.s32.totalorder %s34, 0
      %p144 = por %p142, %p143
      %p145 = scmp.ne.s32.totalorder %s133, %s134
      %p146 = scmp.eq.s32.totalorder %s35, 1
      %p147 = por %p145, %p146
      %p149 = scmp.ne.s32.totalorder %s134, %s148
      %p150 = scmp.eq.s32.totalorder %s35, 0
      %p151 = por %p149, %p150
      %s153 = sadd.s32 %s152, 1
      %p156 = scmp.eq.s32.totalorder %s29, 1
      %p157 = scmp.ne.s32.totalorder %s152, %s154
      %p158 = scmp.eq.s32.totalorder %s29, 0
      %p159 = por %p157, %p158
      %p160 = scmp.ne.s32.totalorder %s152, %s154
      %p161 = scmp.eq.s32.totalorder %s34, 1
      %p162 = por %p160, %p161
      %p163 = scmp.ne.s32.totalorder %s154, %s155
      %p164 = scmp.eq.s32.totalorder %s34, 0
      %p165 = por %p163, %p164
      %p166 = scmp.ne.s32.totalorder %s154, %s155
      %p167 = scmp.eq.s32.totalorder %s35, 1
      %p168 = por %p166, %p167
      %p170 = scmp.ne.s32.totalorder %s155, %s169
      %p171 = scmp.eq.s32.totalorder %s35, 0
      %p172 = por %p170, %p171
      %s174 = sadd.s32 %s173, 1
      %p177 = scmp.eq.s32.totalorder %s29, 1
      %p178 = scmp.ne.s32.totalorder %s173, %s175
      %p179 = scmp.eq.s32.totalorder %s29, 0
      %p180 = por %p178, %p179
      %p181 = scmp.ne.s32.totalorder %s173, %s175
      %p182 = scmp.eq.s32.totalorder %s34, 1
      %p183 = por %p181, %p182
      %p184 = scmp.ne.s32.totalorder %s175, %s176
      %p185 = scmp.eq.s32.totalorder %s34, 0
      %p186 = por %p184, %p185
      %p187 = scmp.ne.s32.totalorder %s175, %s176
      %p188 = scmp.eq.s32.totalorder %s35, 1
      %p189 = por %p187, %p188
      %p191 = scmp.ne.s32.totalorder %s176, %s190
      %p192 = scmp.eq.s32.totalorder %s35, 0
      %p193 = por %p191, %p192
      %s195 = sadd.s32 %s194, 1
      %p198 = scmp.eq.s32.totalorder %s29, 1
      %p199 = scmp.ne.s32.totalorder %s194, %s196
      %p200 = scmp.eq.s32.totalorder %s29, 0
      %p201 = por %p199, %p200
      %p202 = scmp.ne.s32.totalorder %s194, %s196
      %p203 = scmp.eq.s32.totalorder %s34, 1
      %p204 = por %p202, %p203
      %p205 = scmp.ne.s32.totalorder %s196, %s197
      %p206 = scmp.eq.s32.totalorder %s34, 0
      %p207 = por %p205, %p206
      %p208 = scmp.ne.s32.totalorder %s196, %s197
      %p209 = scmp.eq.s32.totalorder %s35, 1
      %p210 = por %p208, %p209
      %p212 = scmp.ne.s32.totalorder %s197, %s211
      %p213 = scmp.eq.s32.totalorder %s35, 0
      %p214 = por %p212, %p213
      %s215 = ssub.s32 %s29, %s36
      %p216 = scmp.eq.s32.totalorder %s215, 0
      %s218 = sadd.s32 %s217, 1
      %s219 = scalar_select %p216, %s217, %s218
      %p222 = pneg %p216
      %p223 = scmp.eq.s32.totalorder %s29, 1
      %p224 = por %p222, %p223
      %p225 = scmp.ne.s32.totalorder %s217, %s220
      %p226 = scmp.eq.s32.totalorder %s29, 0
      %p227 = por %p225, %p226
      %p228 = scmp.ne.s32.totalorder %s217, %s220
      %p229 = scmp.eq.s32.totalorder %s34, 1
      %p230 = por %p228, %p229
      %p231 = scmp.ne.s32.totalorder %s220, %s221
      %p232 = scmp.eq.s32.totalorder %s34, 0
      %p233 = por %p231, %p232
      %p234 = scmp.ne.s32.totalorder %s220, %s221
      %p235 = scmp.eq.s32.totalorder %s35, 1
      %p236 = por %p234, %p235
      %p238 = scmp.ne.s32.totalorder %s221, %s237
      %p239 = scmp.eq.s32.totalorder %s35, 0
      %p240 = por %p238, %p239
      %s241 = ssub.s32 %s29, %s36
      %p242 = scmp.eq.s32.totalorder %s241, 0
      %s244 = sadd.s32 %s243, 1
      %s245 = scalar_select %p242, %s243, %s244
      %p248 = pneg %p242
      %p249 = scmp.eq.s32.totalorder %s29, 1
      %p250 = por %p248, %p249
      %p251 = scmp.ne.s32.totalorder %s243, %s246
      %p252 = scmp.eq.s32.totalorder %s29, 0
      %p253 = por %p251, %p252
      %p254 = scmp.ne.s32.totalorder %s243, %s246
      %p255 = scmp.eq.s32.totalorder %s34, 1
      %p256 = por %p254, %p255
      %p257 = scmp.ne.s32.totalorder %s246, %s247
      %p258 = scmp.eq.s32.totalorder %s34, 0
      %p259 = por %p257, %p258
      %p260 = scmp.ne.s32.totalorder %s246, %s247
      %p261 = scmp.eq.s32.totalorder %s35, 1
      %p262 = por %p260, %p261
      %p264 = scmp.ne.s32.totalorder %s247, %s263
      %p265 = scmp.eq.s32.totalorder %s35, 0
      %p266 = por %p264, %p265
      %p267 = scmp.le.s32.totalorder 1, %s29
      %p268 = scmp.lt.s32.totalorder %s29, 3
      %p269 = pnand %p267, %p268
      %p270 = pneg %p269
      // Predicated region
      $region9: #{tpu_custom_call.1} parent=5 // pred_check
        _
      $region10: #{tpu_custom_call.1} parent=5 // pred_check_branch
        %272 = sbr.rel (%p269) target = $region12
      $region11: #{tpu_custom_call.1} parent=5 // pred_region
        %s273 = ssub.s32 %s29, 1
        // Predicated region
        $region13: #{tpu_custom_call.1} parent=11 // pred_check
          %p274 = pneg %p102
        $region14: #{tpu_custom_call.1} parent=11 // pred_check_branch
          %276 = sbr.rel (%p274) target = $region16
        $region15: #{tpu_custom_call.1} parent=11 // pred_region
          %s278 = ssub.s32 256, 256
          %279 = vsyncadd [#allocation6], %s278
          %s280 = sshll.u32 [#allocation7], 4
          %s281 = int_to_ptr.vmem [resolvable:$true] %s280
          %286 = dma.hbm_to_vmem [thread:$0]  %s2, 256, %s281, [#allocation6], 64, 64, 4
        $region16: #{tpu_custom_call.1} parent=11 // pred_fallthru
          _
        // Predicated region
        $region17: #{tpu_custom_call.1} parent=11 // pred_check
          %p287 = pneg %p123
        $region18: #{tpu_custom_call.1} parent=11 // pred_check_branch
          %289 = sbr.rel (%p287) target = $region20
        $region19: #{tpu_custom_call.1} parent=11 // pred_region
          _
        $region20: #{tpu_custom_call.1} parent=11 // pred_fallthru
          _
        // Predicated region
        $region21: #{tpu_custom_call.1} parent=11 // pred_check
          %p290 = pneg %p144
        $region22: #{tpu_custom_call.1} parent=11 // pred_check_branch
          %292 = sbr.rel (%p290) target = $region24
        $region23: #{tpu_custom_call.1} parent=11 // pred_region
          %s294 = ssub.s32 256, 256
          %295 = vsyncadd [#allocation9], %s294
          %s296 = sshll.u32 [#allocation8], 4
          %s297 = int_to_ptr.vmem [resolvable:$true] %s296
          %302 = dma.hbm_to_vmem [thread:$0]  %s4, 256, %s297, [#allocation9], 64, 64, 4
        $region24: #{tpu_custom_call.1} parent=11 // pred_fallthru
          _
        // Predicated region
        $region25: #{tpu_custom_call.1} parent=11 // pred_check
          %p303 = pneg %p165
        $region26: #{tpu_custom_call.1} parent=11 // pred_check_branch
          %305 = sbr.rel (%p303) target = $region28
        $region27: #{tpu_custom_call.1} parent=11 // pred_region
          _
        $region28: #{tpu_custom_call.1} parent=11 // pred_fallthru
          _
        // Predicated region
        $region29: #{tpu_custom_call.1} parent=11 // pred_check
          %p306 = pneg %p186
        $region30: #{tpu_custom_call.1} parent=11 // pred_check_branch
          %308 = sbr.rel (%p306) target = $region32
        $region31: #{tpu_custom_call.1} parent=11 // pred_region
          _
        $region32: #{tpu_custom_call.1} parent=11 // pred_fallthru
          _
        // Predicated region
        $region33: #{tpu_custom_call.1} parent=11 // pred_check
          %p309 = pneg %p207
        $region34: #{tpu_custom_call.1} parent=11 // pred_check_branch
          %311 = sbr.rel (%p309) target = $region36
        $region35: #{tpu_custom_call.1} parent=11 // pred_region
          _
        $region36: #{tpu_custom_call.1} parent=11 // pred_fallthru
          _
      $region12: #{tpu_custom_call.1} parent=5 // pred_fallthru
        _
      %p312 = scmp.lt.s32.totalorder %s29, 2
      // Predicated region
      $region37: #{tpu_custom_call.1} parent=5 // pred_check
        %p313 = pneg %p312
      $region38: #{tpu_custom_call.1} parent=5 // pred_check_branch
        %315 = sbr.rel (%p313) target = $region40
      $region39: #{tpu_custom_call.1} parent=5 // pred_region
        // Predicated region
        $region41: #{tpu_custom_call.1} parent=39 // pred_check
          %p316 = pneg %p49
        $region42: #{tpu_custom_call.1} parent=39 // pred_check_branch
          %318 = sbr.rel (%p316) target = $region44
        $region43: #{tpu_custom_call.1} parent=39 // pred_region
          %s319 = sand.u32 %s39, 1
          %s320 = scalar_lea.sflag [#allocation3], %s319
          %s321 = sand.u32 %s39, 1
          %s322 = scalar_lea.vmem [#allocation2], %s321
          %s324 = ssub.s32 16, 16
          %325 = vsyncadd %s320, %s324
          %s326 = smul.addr %s29, 16
          %s327 = scalar_lea.hbm %s0, %s326
          %s329 = sshll.u32 %s322, 4
          %s330 = int_to_ptr.vmem [resolvable:$true] %s329
          %332 = dma.hbm_to_vmem [thread:$0]  %s327, 16, %s330, %s320
        $region44: #{tpu_custom_call.1} parent=39 // pred_fallthru
          _
        // Predicated region
        $region45: #{tpu_custom_call.1} parent=39 // pred_check
          %p333 = pneg %p75
        $region46: #{tpu_custom_call.1} parent=39 // pred_check_branch
          %335 = sbr.rel (%p333) target = $region48
        $region47: #{tpu_custom_call.1} parent=39 // pred_region
          %s336 = sand.u32 %s29, 1
          %s337 = scalar_lea.sflag [#allocation6], %s336
          %s338 = sand.u32 %s65, 1
          %s339 = smul.addr %s338, 16
          %s340 = scalar_lea.vmem [#allocation5], %s339
          %s342 = ssub.s32 256, 256
          %343 = vsyncadd %s337, %s342
          %s344 = smul.addr %s29, 2
          %s345 = smul.addr %s344, 128
          %s346 = scalar_lea.hbm %s1, %s345
          %s347 = sshll.u32 %s340, 4
          %s348 = int_to_ptr.vmem [resolvable:$true] %s347
          %353 = dma.hbm_to_vmem [thread:$0]  %s346, 256, %s348, %s337, 128, 128, 8
        $region48: #{tpu_custom_call.1} parent=39 // pred_fallthru
          _
      $region40: #{tpu_custom_call.1} parent=5 // pred_fallthru
        _
      %p354 = scmp.le.s32.totalorder 1, %s29
      %p355 = scmp.lt.s32.totalorder %s29, 3
      %p356 = pnand %p354, %p355
      %p357 = pneg %p356
      // Predicated region
      $region49: #{tpu_custom_call.1} parent=5 // pred_check
        _
      $region50: #{tpu_custom_call.1} parent=5 // pred_check_branch
        %359 = sbr.rel (%p356) target = $region52
      $region51: #{tpu_custom_call.1} parent=5 // pred_region
        %s360 = ssub.s32 %s29, 1
        %s361 = sand.u32 %s42, 1
        %s362 = scalar_lea.sflag [#allocation3], %s361
        %s363 = sand.u32 %s42, 1
        %s364 = scalar_lea.vmem [#allocation2], %s363
        // Predicated region
        $region53: #{tpu_custom_call.1} parent=51 // pred_check
          %p365 = pneg %p55
        $region54: #{tpu_custom_call.1} parent=51 // pred_check_branch
          %367 = sbr.rel (%p365) target = $region56
        $region55: #{tpu_custom_call.1} parent=51 // pred_region
          %368 = dma.done %s362, 16
        $region56: #{tpu_custom_call.1} parent=51 // pred_fallthru
          _
        %s369 = sand.u32 %s34, 1
        %s370 = scalar_lea.sflag [#allocation6], %s369
        %s371 = sand.u32 %s68, 1
        %s372 = smul.addr %s371, 16
        %s373 = scalar_lea.vmem [#allocation5], %s372
        // Predicated region
        $region57: #{tpu_custom_call.1} parent=51 // pred_check
          %p374 = pneg %p81
        $region58: #{tpu_custom_call.1} parent=51 // pred_check_branch
          %376 = sbr.rel (%p374) target = $region60
        $region59: #{tpu_custom_call.1} parent=51 // pred_region
          %377 = dma.done %s370, 256
        $region60: #{tpu_custom_call.1} parent=51 // pred_fallthru
          _
        // Predicated region
        $region61: #{tpu_custom_call.1} parent=51 // pred_check
          %p378 = pneg %p102
        $region62: #{tpu_custom_call.1} parent=51 // pred_check_branch
          %380 = sbr.rel (%p378) target = $region64
        $region63: #{tpu_custom_call.1} parent=51 // pred_region
          %381 = dma.done [#allocation6], 256
        $region64: #{tpu_custom_call.1} parent=51 // pred_fallthru
          _
        // Predicated region
        $region65: #{tpu_custom_call.1} parent=51 // pred_check
          %p382 = pneg %p144
        $region66: #{tpu_custom_call.1} parent=51 // pred_check_branch
          %384 = sbr.rel (%p382) target = $region68
        $region67: #{tpu_custom_call.1} parent=51 // pred_region
          %385 = dma.done [#allocation9], 256
        $region68: #{tpu_custom_call.1} parent=51 // pred_fallthru
          _
        %s386 = sand.u32 %s42, 1
        %s387 = scalar_lea.sflag [#allocation3], %s386
        %s388 = sand.u32 %s42, 1
        %s389 = scalar_lea.vmem [#allocation2], %s388
        %p390 = pneg %p55
        %p391 = pneg %p52
        %s392 = sand.u32 %s34, 1
        %s393 = scalar_lea.sflag [#allocation6], %s392
        %s394 = sand.u32 %s68, 1
        %s395 = smul.addr %s394, 16
        %s396 = scalar_lea.vmem [#allocation5], %s395
        %p397 = pneg %p81
        %p398 = pneg %p78
        %p399 = pneg %p102
        %p400 = pneg %p99
        %p401 = pneg %p123
        %p402 = pneg %p120
        %p403 = pneg %p144
        %p404 = pneg %p141
        %p405 = pneg %p165
        %p406 = pneg %p162
        %p407 = pneg %p186
        %p408 = pneg %p183
        %p409 = pneg %p207
        %p410 = pneg %p204
        %p411 = pneg %p233
        %p412 = pneg %p230
        %s413 = sand.u32 %s220, 1
        %s414 = scalar_lea.sflag [#allocation4], %s413
        %s415 = sand.u32 %s220, 1
        %s416 = smul.addr %s415, 16
        %s417 = scalar_lea.vmem [#allocation10], %s416
        %p418 = pneg %p259
        %p419 = pneg %p256
        %s420 = sand.u32 %s246, 1
        %s421 = scalar_lea.sflag [#allocation12], %s420
        %s422 = sand.u32 %s246, 1
        %s423 = smul.addr %s422, 32
        %s424 = scalar_lea.vmem [#allocation11], %s423
        %v426 = vld [vmem:[%s373] sm:$0xff]
        %v427 = vld [vmem:[%s373 + $0x8] sm:$0xff]
        %v428 = vpack.c.bf16 %v427, %v426
        %v429 = vld [vmem:[#allocation7] sm:$0xf]
        %v430 = vld [vmem:[#allocation7 + $0x4] sm:$0xf]
        %v431 = vld [vmem:[#allocation7 + $0x8] sm:$0xf]
        %v432 = vld [vmem:[#allocation7 + $0xc] sm:$0xf]
        %v433 = vld [vmem:[%s3] sm:$0x1]
        %v435 = vlaneseq
        %v436 = vshrl.u32 %v435, 7
        %v437 = vsub.s32 0, %v436
        %v438 = vrot.slane %v433, %v437
        %v444 = vunpack.c.l.b16 %v429
        %v445 = vunpack.c.l.b16 %v430
        %v446 = vunpack.c.l.b16 %v431
        %v447 = vunpack.c.l.b16 %v432
        %v448 = vpack.c.b16 %v445, %v444
        %v449 = vpack.c.b16 %v447, %v446
        %vm452 = vcmask 261120
        %v454 = vsel %vm452, %v428, 0
        %456 = vmatprep.subr.bf16.mxu0 0
        %457 = vmatpush1.bf16.msra.mxu0 0
        %458 = vmatprep.subr.bf16.mxu0 0
        %459 = vmatpush1.bf16.msra.mxu0 0
        %460 = vmatprep.subr.bf16.mxu0 0
        %461 = vmatpush1.bf16.msra.mxu0 0
        %462 = vmatprep.subr.bf16.mxu0 0
        %463 = vmatpush1.bf16.msra.mxu0 0
        %464 = vmatprep.subr.bf16.mxu0 0
        %465 = vmatpush1.bf16.msra.mxu0 0
        %466 = vmatprep.subr.bf16.mxu0 0
        %467 = vmatpush1.bf16.msra.mxu0 0
        %468 = vmatprep.subr.bf16.mxu0 0
        %469 = vmatpush1.bf16.msra.mxu0 %v449
        %470 = vmatprep.subr.bf16.mxu0 0
        %471 = vmatpush1.bf16.msra.mxu0 %v448
        %472 = vmatprep.subr.bf16.mxu0 0
        %473 = vmatpush2.bf16.msra.mxu0 0
        %474 = vmatprep.subr.bf16.mxu0 0
        %475 = vmatpush2.bf16.msra.mxu0 0
        %476 = vmatprep.subr.bf16.mxu0 0
        %477 = vmatpush2.bf16.msra.mxu0 0
        %478 = vmatprep.subr.bf16.mxu0 0
        %479 = vmatpush2.bf16.msra.mxu0 0
        %480 = vmatprep.subr.bf16.mxu0 0
        %481 = vmatpush2.bf16.msra.mxu0 0
        %482 = vmatprep.subr.bf16.mxu0 0
        %483 = vmatpush2.bf16.msra.mxu0 0
        %484 = vmatprep.subr.bf16.mxu0 0
        %485 = vmatpush2.bf16.msra.mxu0 0
        %486 = vmatprep.subr.bf16.mxu0 0
        %487 = vmatpush2.bf16.msra.mxu0 0
        %488 = vmatprep.mubr.bf16.mxu0 0
        %489 = vmatmul.mubr.bf16.gmra.mxu0 %v454
        %v490 = vpop.f32.mrf.mxu0
        %v491 = vadd.f32 %v438, %v490
        %v492 = vpop.f32.mrf.mxu0
        %v493 = vpop.f32.mrf.mxu0
        %v494 = vadd.f32 %v438, %v493
        %v495 = vpop.f32.mrf.mxu0
        %496 = vdwg.mxu0
        %v497 = vld [vmem:[%s364] sm:$0x1]
        %v498 = vld [vmem:[#allocation8] sm:$0xf]
        %v499 = vld [vmem:[#allocation8 + $0x4] sm:$0xf]
        %v500 = vld [vmem:[#allocation8 + $0x8] sm:$0xf]
        %v501 = vld [vmem:[#allocation8 + $0xc] sm:$0xf]
        %v502 = vld [vmem:[%s5] sm:$0x1]
        %v503 = vld [vmem:[%s6] sm:$0x1]
        %v504 = vld [vmem:[%s7] sm:$0x1]
        %vm505 = vcmp.ne.s32.totalorder %v497, 0
        %v506 = vsel %vm505, -1e+30, 0.0
        %v507 = vpack.c.bf16 %v494, %v491
        %509 = vrot.lane.b32.xlu0 %v507, 96
        %v510 = vpop.permute.xlu0 %509
        %vm511 = vcmask 130048
        %v513 = vsel %vm511, %v507, 0
        %v516 = vsel %vm511, %v510, 0
        %518 = vmatprep.subr.bf16.mxu0 0
        %519 = vmatpush1.bf16.xpose.msra.mxu0 0
        %520 = vmatprep.subr.bf16.mxu0 0
        %521 = vmatpush1.bf16.xpose.msra.mxu0 0
        %522 = vmatprep.subr.bf16.mxu0 0
        %523 = vmatpush1.bf16.xpose.msra.mxu0 0
        %524 = vmatprep.subr.bf16.mxu0 0
        %525 = vmatpush1.bf16.xpose.msra.mxu0 0
        %526 = vmatprep.subr.bf16.mxu0 0
        %527 = vmatpush1.bf16.xpose.msra.mxu0 0
        %528 = vmatprep.subr.bf16.mxu0 0
        %529 = vmatpush1.bf16.xpose.msra.mxu0 0
        %530 = vmatprep.subr.bf16.mxu0 0
        %531 = vmatpush1.bf16.xpose.msra.mxu0 0
        %532 = vmatprep.subr.bf16.mxu0 0
        %533 = vmatpush1.bf16.xpose.msra.mxu0 %v516
        %534 = vmatprep.subr.bf16.mxu0 0
        %535 = vmatpush2.bf16.xpose.msra.mxu0 0
        %536 = vmatprep.subr.bf16.mxu0 0
        %537 = vmatpush2.bf16.xpose.msra.mxu0 0
        %538 = vmatprep.subr.bf16.mxu0 0
        %539 = vmatpush2.bf16.xpose.msra.mxu0 0
        %540 = vmatprep.subr.bf16.mxu0 0
        %541 = vmatpush2.bf16.xpose.msra.mxu0 0
        %542 = vmatprep.subr.bf16.mxu0 0
        %543 = vmatpush2.bf16.xpose.msra.mxu0 0
        %544 = vmatprep.subr.bf16.mxu0 0
        %545 = vmatpush2.bf16.xpose.msra.mxu0 0
        %546 = vmatprep.subr.bf16.mxu0 0
        %547 = vmatpush2.bf16.xpose.msra.mxu0 0
        %548 = vmatprep.subr.bf16.mxu0 0
        %549 = vmatpush2.bf16.xpose.msra.mxu0 0
        %550 = vmatprep.mubr.bf16.mxu0 0
        %551 = vmatmul.mubr.bf16.gmra.mxu0 %v513
        %v552 = vpop.f32.mrf.mxu0
        %v553 = vadd.f32 0.0, %v552
        %v554 = vpop.f32.mrf.mxu0
        %v555 = vpop.f32.mrf.mxu0
        %v556 = vadd.f32 0.0, %v555
        %v557 = vpop.f32.mrf.mxu0
        %558 = vdwg.mxu0
        %v559 = vmul.f32 %v553, 0.25
        %v560 = vmul.f32 %v556, 0.25
        %v562 = vlaneseq
        %v563 = vshrl.u32 %v562, 7
        %v564 = vsub.s32 0, %v563
        %v565 = vrot.slane %v506, %v564
        %v567 = vadd.f32 %v559, %v565
        %v568 = vadd.f32 %v560, %v565
        %v569 = vsel %vm511, %v567, -inf
        %570 = vmax.xlane.f32.xlu0 %v569
        %v571 = vpop.xlane.xlu0 %570
        %v572 = vsel %vm511, %v568, -inf
        %573 = vmax.xlane.f32.xlu0 %v572
        %v574 = vpop.xlane.xlu0 %573
        %v575 = vsub.f32 %v567, %v571
        %v576 = vsub.f32 %v568, %v574
        %v577 = vmul.f32 %v575, 1.442695
        %v578 = vpow.pop %v577
        %v579 = vmul.f32 %v576, 1.442695
        %v580 = vpow.pop %v579
        %v581 = vsel %vm511, %v578, 0.0
        %582 = vadd.xlane.f32.xlu0 %v581
        %v583 = vpop.xlane.xlu0 %582
        %v584 = vsel %vm511, %v580, 0.0
        %585 = vadd.xlane.f32.xlu0 %v584
        %v586 = vpop.xlane.xlu0 %585
        %v587 = vrcp.pop %v583
        %v588 = vmul.f32 %v578, %v587
        %v589 = vrcp.pop %v586
        %v590 = vmul.f32 %v580, %v589
        %591 = vst.msk [vmem:[%s424] sm:$0xff] %vm511, %v588
        %592 = vst.msk [vmem:[%s424 + $0x8] sm:$0xff] %vm511, %v590
        %v593 = vpack.c.bf16 %v590, %v588
        %594 = vrot.lane.b32.xlu0 %v507, 64
        %v595 = vpop.permute.xlu0 %594
        %v598 = vsel %vm511, %v593, 0
        %600 = vmatprep.subr.bf16.mxu0 0
        %601 = vmatpush1.bf16.msra.mxu0 0
        %602 = vmatprep.subr.bf16.mxu0 0
        %603 = vmatpush1.bf16.msra.mxu0 0
        %604 = vmatprep.subr.bf16.mxu0 0
        %605 = vmatpush1.bf16.msra.mxu0 0
        %606 = vmatprep.subr.bf16.mxu0 0
        %607 = vmatpush1.bf16.msra.mxu0 0
        %608 = vmatprep.subr.bf16.mxu0 0
        %609 = vmatpush1.bf16.msra.mxu0 0
        %610 = vmatprep.subr.bf16.mxu0 0
        %611 = vmatpush1.bf16.msra.mxu0 0
        %612 = vmatprep.subr.bf16.mxu0 0
        %613 = vmatpush1.bf16.msra.mxu0 0
        %614 = vmatprep.subr.bf16.mxu0 0
        %615 = vmatpush1.bf16.msra.mxu0 %v595
        %616 = vmatprep.subr.bf16.mxu0 0
        %617 = vmatpush2.bf16.msra.mxu0 0
        %618 = vmatprep.subr.bf16.mxu0 0
        %619 = vmatpush2.bf16.msra.mxu0 0
        %620 = vmatprep.subr.bf16.mxu0 0
        %621 = vmatpush2.bf16.msra.mxu0 0
        %622 = vmatprep.subr.bf16.mxu0 0
        %623 = vmatpush2.bf16.msra.mxu0 0
        %624 = vmatprep.subr.bf16.mxu0 0
        %625 = vmatpush2.bf16.msra.mxu0 0
        %626 = vmatprep.subr.bf16.mxu0 0
        %627 = vmatpush2.bf16.msra.mxu0 0
        %628 = vmatprep.subr.bf16.mxu0 0
        %629 = vmatpush2.bf16.msra.mxu0 0
        %630 = vmatprep.subr.bf16.mxu0 0
        %631 = vmatpush2.bf16.msra.mxu0 0
        %632 = vmatprep.mubr.bf16.mxu0 0
        %633 = vmatmul.mubr.bf16.gmra.mxu0 %v598
        %v634 = vpop.f32.mrf.mxu0
        %v635 = vadd.f32 0.0, %v634
        %v636 = vpop.f32.mrf.mxu0
        %v637 = vpop.f32.mrf.mxu0
        %v638 = vadd.f32 0.0, %v637
        %v639 = vpop.f32.mrf.mxu0
        %640 = vdwg.mxu0
        %641 = vrot.lane.b32.xlu0 %v507, 112
        %v642 = vpop.permute.xlu0 %641
        %643 = vrot.lane.b32.xlu0 %v507, 80
        %v644 = vpop.permute.xlu0 %643
        %v646 = vsel %vm511, %v642, 0
        %v649 = vsel %vm511, %v644, 0
        %651 = vmatprep.subr.bf16.mxu0 0
        %652 = vmatpush1.bf16.xpose.msra.mxu0 0
        %653 = vmatprep.subr.bf16.mxu0 0
        %654 = vmatpush1.bf16.xpose.msra.mxu0 0
        %655 = vmatprep.subr.bf16.mxu0 0
        %656 = vmatpush1.bf16.xpose.msra.mxu0 0
        %657 = vmatprep.subr.bf16.mxu0 0
        %658 = vmatpush1.bf16.xpose.msra.mxu0 0
        %659 = vmatprep.subr.bf16.mxu0 0
        %660 = vmatpush1.bf16.xpose.msra.mxu0 0
        %661 = vmatprep.subr.bf16.mxu0 0
        %662 = vmatpush1.bf16.xpose.msra.mxu0 0
        %663 = vmatprep.subr.bf16.mxu0 0
        %664 = vmatpush1.bf16.xpose.msra.mxu0 0
        %665 = vmatprep.subr.bf16.mxu0 0
        %666 = vmatpush1.bf16.xpose.msra.mxu0 %v649
        %667 = vmatprep.subr.bf16.mxu0 0
        %668 = vmatpush2.bf16.xpose.msra.mxu0 0
        %669 = vmatprep.subr.bf16.mxu0 0
        %670 = vmatpush2.bf16.xpose.msra.mxu0 0
        %671 = vmatprep.subr.bf16.mxu0 0
        %672 = vmatpush2.bf16.xpose.msra.mxu0 0
        %673 = vmatprep.subr.bf16.mxu0 0
        %674 = vmatpush2.bf16.xpose.msra.mxu0 0
        %675 = vmatprep.subr.bf16.mxu0 0
        %676 = vmatpush2.bf16.xpose.msra.mxu0 0
        %677 = vmatprep.subr.bf16.mxu0 0
        %678 = vmatpush2.bf16.xpose.msra.mxu0 0
        %679 = vmatprep.subr.bf16.mxu0 0
        %680 = vmatpush2.bf16.xpose.msra.mxu0 0
        %681 = vmatprep.subr.bf16.mxu0 0
        %682 = vmatpush2.bf16.xpose.msra.mxu0 0
        %683 = vmatprep.mubr.bf16.mxu0 0
        %684 = vmatmul.mubr.bf16.gmra.mxu0 %v646
        %v685 = vpop.f32.mrf.mxu0
        %v686 = vadd.f32 0.0, %v685
        %v687 = vpop.f32.mrf.mxu0
        %v688 = vpop.f32.mrf.mxu0
        %v689 = vadd.f32 0.0, %v688
        %v690 = vpop.f32.mrf.mxu0
        %691 = vdwg.mxu0
        %v692 = vmul.f32 %v686, 0.25
        %v693 = vmul.f32 %v689, 0.25
        %v694 = vadd.f32 %v692, %v565
        %v695 = vadd.f32 %v693, %v565
        %v696 = vsel %vm511, %v694, -inf
        %697 = vmax.xlane.f32.xlu0 %v696
        %v698 = vpop.xlane.xlu0 %697
        %v699 = vsel %vm511, %v695, -inf
        %700 = vmax.xlane.f32.xlu0 %v699
        %v701 = vpop.xlane.xlu0 %700
        %v702 = vsub.f32 %v694, %v698
        %v703 = vsub.f32 %v695, %v701
        %v704 = vmul.f32 %v702, 1.442695
        %v705 = vpow.pop %v704
        %v706 = vmul.f32 %v703, 1.442695
        %v707 = vpow.pop %v706
        %v708 = vsel %vm511, %v705, 0.0
        %709 = vadd.xlane.f32.xlu0 %v708
        %v710 = vpop.xlane.xlu0 %709
        %v711 = vsel %vm511, %v707, 0.0
        %712 = vadd.xlane.f32.xlu0 %v711
        %v713 = vpop.xlane.xlu0 %712
        %v714 = vrcp.pop %v710
        %v715 = vmul.f32 %v705, %v714
        %v716 = vrcp.pop %v713
        %v717 = vmul.f32 %v707, %v716
        %s718 = scalar_lea.vmem %s424, 16 [#allocation11]
        %719 = vst.msk [vmem:[%s718] sm:$0xff] %vm511, %v715
        %720 = vst.msk [vmem:[%s718 + $0x8] sm:$0xff] %vm511, %v717
        %v721 = vpack.c.bf16 %v717, %v715
        %722 = vrot.lane.b32.xlu0 %v507, 48
        %v723 = vpop.permute.xlu0 %722
        %v726 = vsel %vm511, %v721, 0
        %728 = vmatprep.subr.bf16.mxu0 0
        %729 = vmatpush1.bf16.msra.mxu0 0
        %730 = vmatprep.subr.bf16.mxu0 0
        %731 = vmatpush1.bf16.msra.mxu0 0
        %732 = vmatprep.subr.bf16.mxu0 0
        %733 = vmatpush1.bf16.msra.mxu0 0
        %734 = vmatprep.subr.bf16.mxu0 0
        %735 = vmatpush1.bf16.msra.mxu0 0
        %736 = vmatprep.subr.bf16.mxu0 0
        %737 = vmatpush1.bf16.msra.mxu0 0
        %738 = vmatprep.subr.bf16.mxu0 0
        %739 = vmatpush1.bf16.msra.mxu0 0
        %740 = vmatprep.subr.bf16.mxu0 0
        %741 = vmatpush1.bf16.msra.mxu0 0
        %742 = vmatprep.subr.bf16.mxu0 0
        %743 = vmatpush1.bf16.msra.mxu0 %v723
        %744 = vmatprep.subr.bf16.mxu0 0
        %745 = vmatpush2.bf16.msra.mxu0 0
        %746 = vmatprep.subr.bf16.mxu0 0
        %747 = vmatpush2.bf16.msra.mxu0 0
        %748 = vmatprep.subr.bf16.mxu0 0
        %749 = vmatpush2.bf16.msra.mxu0 0
        %750 = vmatprep.subr.bf16.mxu0 0
        %751 = vmatpush2.bf16.msra.mxu0 0
        %752 = vmatprep.subr.bf16.mxu0 0
        %753 = vmatpush2.bf16.msra.mxu0 0
        %754 = vmatprep.subr.bf16.mxu0 0
        %755 = vmatpush2.bf16.msra.mxu0 0
        %756 = vmatprep.subr.bf16.mxu0 0
        %757 = vmatpush2.bf16.msra.mxu0 0
        %758 = vmatprep.subr.bf16.mxu0 0
        %759 = vmatpush2.bf16.msra.mxu0 0
        %760 = vmatprep.mubr.bf16.mxu0 0
        %761 = vmatmul.mubr.bf16.gmra.mxu0 %v726
        %v762 = vpop.f32.mrf.mxu0
        %v763 = vadd.f32 0.0, %v762
        %v764 = vpop.f32.mrf.mxu0
        %v765 = vpop.f32.mrf.mxu0
        %v766 = vadd.f32 0.0, %v765
        %v767 = vpop.f32.mrf.mxu0
        %768 = vdwg.mxu0
        %771 = vrot.lane.b32.xlu0 %v763, 16
        %v772 = vpop.permute.xlu0 %771
        %773 = vrot.lane.b32.xlu0 %v766, 16
        %v774 = vpop.permute.xlu0 %773
        %v777 = vsel %vm511, %v635, %v772
        %v778 = vsel %vm511, %v638, %v774
        %v779 = vpack.c.bf16 %v778, %v777
        %v781 = vlaneseq
        %v782 = vshrl.u32 %v781, 7
        %v783 = vsub.s32 0, %v782
        %v784 = vrot.slane %v502, %v783
        %v790 = vunpack.c.l.b16 %v498
        %v791 = vunpack.c.l.b16 %v499
        %v792 = vunpack.c.l.b16 %v500
        %v793 = vunpack.c.l.b16 %v501
        %v794 = vpack.c.b16 %v791, %v790
        %v795 = vpack.c.b16 %v793, %v792
        %v799 = vsel %vm452, %v779, 0
        %801 = vmatprep.subr.bf16.mxu0 0
        %802 = vmatpush1.bf16.msra.mxu0 0
        %803 = vmatprep.subr.bf16.mxu0 0
        %804 = vmatpush1.bf16.msra.mxu0 0
        %805 = vmatprep.subr.bf16.mxu0 0
        %806 = vmatpush1.bf16.msra.mxu0 0
        %807 = vmatprep.subr.bf16.mxu0 0
        %808 = vmatpush1.bf16.msra.mxu0 0
        %809 = vmatprep.subr.bf16.mxu0 0
        %810 = vmatpush1.bf16.msra.mxu0 0
        %811 = vmatprep.subr.bf16.mxu0 0
        %812 = vmatpush1.bf16.msra.mxu0 0
        %813 = vmatprep.subr.bf16.mxu0 0
        %814 = vmatpush1.bf16.msra.mxu0 %v795
        %815 = vmatprep.subr.bf16.mxu0 0
        %816 = vmatpush1.bf16.msra.mxu0 %v794
        %817 = vmatprep.subr.bf16.mxu0 0
        %818 = vmatpush2.bf16.msra.mxu0 0
        %819 = vmatprep.subr.bf16.mxu0 0
        %820 = vmatpush2.bf16.msra.mxu0 0
        %821 = vmatprep.subr.bf16.mxu0 0
        %822 = vmatpush2.bf16.msra.mxu0 0
        %823 = vmatprep.subr.bf16.mxu0 0
        %824 = vmatpush2.bf16.msra.mxu0 0
        %825 = vmatprep.subr.bf16.mxu0 0
        %826 = vmatpush2.bf16.msra.mxu0 0
        %827 = vmatprep.subr.bf16.mxu0 0
        %828 = vmatpush2.bf16.msra.mxu0 0
        %829 = vmatprep.subr.bf16.mxu0 0
        %830 = vmatpush2.bf16.msra.mxu0 0
        %831 = vmatprep.subr.bf16.mxu0 0
        %832 = vmatpush2.bf16.msra.mxu0 0
        %833 = vmatprep.mubr.bf16.mxu0 0
        %834 = vmatmul.mubr.bf16.gmra.mxu0 %v799
        %v835 = vpop.f32.mrf.mxu0
        %v836 = vadd.f32 %v784, %v835
        %v837 = vpop.f32.mrf.mxu0
        %v838 = vpop.f32.mrf.mxu0
        %v839 = vadd.f32 %v784, %v838
        %v840 = vpop.f32.mrf.mxu0
        %841 = vdwg.mxu0
        %v842 = vadd.f32 %v836, %v426
        %v843 = vadd.f32 %v839, %v427
        %v844 = vsel %vm452, %v842, 0.0
        %845 = vadd.xlane.f32.xlu0 %v844
        %v846 = vpop.xlane.xlu0 %845
        %v847 = vsel %vm452, %v843, 0.0
        %848 = vadd.xlane.f32.xlu0 %v847
        %v849 = vpop.xlane.xlu0 %848
        %v850 = vrcp.pop 32.0
        %v851 = vmul.f32 %v846, %v850
        %v852 = vmul.f32 %v849, %v850
        %v853 = vsub.f32 %v842, %v851
        %v854 = vsub.f32 %v843, %v852
        %v855 = vmul.f32 %v853, %v853
        %v856 = vmul.f32 %v854, %v854
        %v857 = vsel %vm452, %v855, 0.0
        %858 = vadd.xlane.f32.xlu0 %v857
        %v859 = vpop.xlane.xlu0 %858
        %v860 = vsel %vm452, %v856, 0.0
        %861 = vadd.xlane.f32.xlu0 %v860
        %v862 = vpop.xlane.xlu0 %861
        %v863 = vmul.f32 %v859, %v850
        %v864 = vmul.f32 %v862, %v850
        %v865 = vadd.f32 %v863, 1e-05
        %v866 = vadd.f32 %v864, 1e-05
        %v867 = vrsqrt.pop %v865
        %v868 = vrsqrt.pop %v866
        %v869 = vmul.f32 %v853, %v867
        %v870 = vmul.f32 %v854, %v868
        %v872 = vlaneseq
        %v873 = vshrl.u32 %v872, 7
        %v874 = vsub.s32 0, %v873
        %v875 = vrot.slane %v503, %v874
        %v877 = vmul.f32 %v869, %v875
        %v878 = vmul.f32 %v870, %v875
        %v880 = vlaneseq
        %v881 = vshrl.u32 %v880, 7
        %v882 = vsub.s32 0, %v881
        %v883 = vrot.slane %v504, %v882
        %v885 = vadd.f32 %v877, %v883
        %v886 = vadd.f32 %v878, %v883
        %887 = vst.msk [vmem:[%s417] sm:$0xff] %vm452, %v885
        %888 = vst.msk [vmem:[%s417 + $0x8] sm:$0xff] %vm452, %v886
        %s889 = sand.u32 %s220, 1
        %s890 = scalar_lea.sflag [#allocation4], %s889
        %s891 = sand.u32 %s220, 1
        %s892 = smul.addr %s891, 16
        %s893 = scalar_lea.vmem [#allocation10], %s892
        %s894 = sand.u32 %s246, 1
        %s895 = scalar_lea.sflag [#allocation12], %s894
        %s896 = sand.u32 %s246, 1
        %s897 = smul.addr %s896, 32
        %s898 = scalar_lea.vmem [#allocation11], %s897
        // Predicated region
        $region69: #{tpu_custom_call.1} parent=51 // pred_check
          %p899 = pneg %p230
        $region70: #{tpu_custom_call.1} parent=51 // pred_check_branch
          %901 = sbr.rel (%p899) target = $region72
        $region71: #{tpu_custom_call.1} parent=51 // pred_region
          %s903 = ssub.s32 256, 256
          %904 = vsyncadd %s890, %s903
          %s905 = smul.addr %s34, 2
          %s906 = smul.addr %s905, 128
          %s907 = scalar_lea.hbm %s8, %s906
          %s908 = sshll.u32 %s893, 4
          %s909 = int_to_ptr.vmem [resolvable:$true] %s908
          %914 = dma.vmem_to_hbm [thread:$0]  %s909, 256, %s907, %s890, 128, 128, 8
        $region72: #{tpu_custom_call.1} parent=51 // pred_fallthru
          _
        // Predicated region
        $region73: #{tpu_custom_call.1} parent=51 // pred_check
          %p915 = pneg %p256
        $region74: #{tpu_custom_call.1} parent=51 // pred_check_branch
          %917 = sbr.rel (%p915) target = $region76
        $region75: #{tpu_custom_call.1} parent=51 // pred_region
          #allocation14 [shape = 'u32[6]{0}', space=smem, size = 0x18, scoped, tag = 'DMA stride descriptor']
          %s919 = ssub.s32 512, 512
          %920 = vsyncadd %s895, %s919
          %s921 = smul.addr %s34, 2
          %s922 = smul.addr %s921, 128
          %s923 = scalar_lea.hbm %s9, %s922
          %s925 = sshll.u32 1, 14
          %s926 = sxor.u32 4294967295, %s925
          %s929 = sshll.u32 7, 18
          %s930 = sxor.u32 4294967295, %s929
          %s931 = sand.u32 0, %s930
          %s933 = sor.u32 %s931, 0
          %s934 = sshll.u32 %s898, 4
          %s935 = int_to_ptr.vmem [resolvable:$true] %s934
          %941 = sst [smem:[#allocation14]] 256
          %s942 = scalar_lea.smem [#allocation14], 1
          %943 = sst [smem:[%s942]] 512
          %s944 = scalar_lea.smem [#allocation14], 2
          %945 = sst [smem:[%s944]] 2
          %s946 = scalar_lea.smem [#allocation14], 3
          %947 = sst [smem:[%s946]] 128
          %s948 = scalar_lea.smem [#allocation14], 4
          %949 = sst [smem:[%s948]] 128
          %s950 = scalar_lea.smem [#allocation14], 5
          %951 = sst [smem:[%s950]] 8
          %953 = dma.general %s935, 512, %s923, %s895, 131072, [#allocation14], %s933, 0
        $region76: #{tpu_custom_call.1} parent=51 // pred_fallthru
          _
      $region52: #{tpu_custom_call.1} parent=5 // pred_fallthru
        _
      %p954 = scmp.le.s32.totalorder 2, %s29
      // Predicated region
      $region77: #{tpu_custom_call.1} parent=5 // pred_check
        %p955 = pneg %p954
      $region78: #{tpu_custom_call.1} parent=5 // pred_check_branch
        %957 = sbr.rel (%p955) target = $region80
      $region79: #{tpu_custom_call.1} parent=5 // pred_region
        %s958 = ssub.s32 %s29, 2
        // Predicated region
        $region81: #{tpu_custom_call.1} parent=79 // pred_check
          %p959 = pneg %p236
        $region82: #{tpu_custom_call.1} parent=79 // pred_check_branch
          %961 = sbr.rel (%p959) target = $region84
        $region83: #{tpu_custom_call.1} parent=79 // pred_region
          %s962 = sand.u32 %s221, 1
          %s963 = scalar_lea.sflag [#allocation4], %s962
          %s964 = sand.u32 %s221, 1
          %s965 = smul.addr %s964, 16
          %s966 = scalar_lea.vmem [#allocation10], %s965
          %967 = dma.done %s963, 256
        $region84: #{tpu_custom_call.1} parent=79 // pred_fallthru
          _
        // Predicated region
        $region85: #{tpu_custom_call.1} parent=79 // pred_check
          %p968 = pneg %p262
        $region86: #{tpu_custom_call.1} parent=79 // pred_check_branch
          %970 = sbr.rel (%p968) target = $region88
        $region87: #{tpu_custom_call.1} parent=79 // pred_region
          %s971 = sand.u32 %s247, 1
          %s972 = scalar_lea.sflag [#allocation12], %s971
          %s973 = sand.u32 %s247, 1
          %s974 = smul.addr %s973, 32
          %s975 = scalar_lea.vmem [#allocation11], %s974
          %976 = dma.done %s972, 512
        $region88: #{tpu_custom_call.1} parent=79 // pred_fallthru
          _
      $region80: #{tpu_custom_call.1} parent=5 // pred_fallthru
        _
    $region6: #{tpu_custom_call.1} parent=1 // loop_footer
      %s33 = sadd.s32 1, %s29
    $region7: #{tpu_custom_call.1} parent=1 // loop_footer_branch
      %28 = sbr.rel target = $region3
    $region8: #{tpu_custom_call.1} parent=1 // loop_exit
      _
    %977 = vsyncpa [#allocation3], 1
    %s978 = scalar_lea.sflag [#allocation3], 1
    %979 = vsyncpa %s978, 1
    %980 = vsyncpa [#allocation6], 1
    %s981 = scalar_lea.sflag [#allocation6], 1
    %982 = vsyncpa %s981, 1
    %983 = vsyncpa [#allocation9], 1
    %984 = vsyncpa [#allocation4], 1
    %s985 = scalar_lea.sflag [#allocation4], 1
    %986 = vsyncpa %s985, 1
    %987 = vsyncpa [#allocation12], 1
    %s988 = scalar_lea.sflag [#allocation12], 1
    %989 = vsyncpa %s988, 1

</llo_original>
